<compile_context>
chip_gen: v7x
topology: tpu7x:2x2x1
jax: 0.10.0
libtpu: 0.0.40
codegen_flags: <defaults>
</compile_context>

<pallas_src>
import jax
import jax.numpy as jnp
from jax.experimental import pallas as pl
from jax.experimental.pallas import tpu as pltpu

POWER = 2            # module is only used with power=2
EPS = 1e-7

_LANE = 128
_SUBLANE = {4: 8, 2: 16, 1: 32}            # rows per vreg by itemsize
_TARGET_TILE_F32_BYTES = 4 * 1024 * 1024   # tile sized in f32-equivalent bytes
_MAX_BLOCK_N = 4096
_VMEM_LIMIT_FLOOR = 40 * 1024 * 1024
_VMEM_LIMIT_CEIL = 48 * 1024 * 1024        # < v7x 64 MiB physical per-TC VMEM


def _round_up(v, m):
    return ((v + m - 1) // m) * m


def _choose_block_n(n, itemsize, d_phys):
    """Row-tile size: as many rows as fit ~4 MiB (f32-equiv), sublane-aligned."""
    sub = _SUBLANE.get(itemsize, 8)
    bn = max(sub, (_TARGET_TILE_F32_BYTES // (d_phys * 4)) // sub * sub)
    bn = min(bn, _MAX_BLOCK_N)
    bn = min(bn, _round_up(n, sub))          # never bigger than the whole array
    # Prefer an even number of grid steps so v7x's two TensorCores stay
    # balanced (no effect on single-TC v5e/v6e).  Single adjustment heuristic.
    steps = pl.cdiv(n, bn)
    if steps > 1 and steps % 2 == 1:
        bn2 = max(sub, _round_up(pl.cdiv(n, steps + 1), sub))
        if pl.cdiv(n, bn2) % 2 == 0:
            bn = bn2
    return bn


def _normalize_kernel(x_ref, o_ref):
    x = x_ref[...]                                   # (block_n, D) logical view
    xf = x.astype(jnp.float32)                       # f32 accumulation (no-op for f32)
    # Mosaic masks the physical pad lanes of the unaligned last dim in the
    # reduction, so the row sum only sees the D valid columns.
    s = jnp.sum(xf * xf, axis=1, keepdims=True)      # (block_n, 1) f32
    # Exact module semantics: 1 / (||x||_2 + eps).  sqrt + exact reciprocal run
    # on the EUP over a (block_n, 1) column -> negligible next to HBM traffic.
    inv = pl.reciprocal(jnp.sqrt(s) + EPS, approx=False)
    if x.dtype == jnp.float32:
        o_ref[...] = xf * inv
    else:
        # Scale in the input dtype: avoids a second full-tile pass through the
        # f32 upcast copy plus a downcast (v6e/v7x VPUs are bf16-native).
        o_ref[...] = (x * inv.astype(x.dtype)).astype(o_ref.dtype)


def l2_normalize(x, *, block_n=None):
    assert x.ndim == 2, f"wrong shape {x.shape} for L2-Norm"
    N, D = x.shape
    itemsize = jnp.dtype(x.dtype).itemsize
    d_phys = _round_up(D, _LANE)                     # physical lanes per row in VMEM

    if block_n is None:
        block_n = _choose_block_n(N, itemsize, d_phys)
    grid = (pl.cdiv(N, block_n),)

    # VMEM budget: double-buffered in + out tiles plus in-kernel f32 temporaries.
    tile_in_bytes = block_n * d_phys * itemsize
    tile_f32_bytes = block_n * d_phys * 4
    needed = 4 * tile_in_bytes + 2 * tile_f32_bytes + (2 << 20)
    vmem_limit = min(max(_VMEM_LIMIT_FLOOR, needed), _VMEM_LIMIT_CEIL)
    # TODO(synk): for extremely wide rows (needed > ceil even at the minimum
    # 8/16-row tile) a D-blocked two-pass kernel (per-row accumulator +
    # pl.when finalize) would be required; not implemented here.

    return pl.pallas_call(
        _normalize_kernel,
        out_shape=jax.ShapeDtypeStruct((N, D), x.dtype),
        grid_spec=pltpu.PrefetchScalarGridSpec(
            num_scalar_prefetch=0,
            grid=grid,
            # Last-dim block = full array extent D (allowed even if D%128!=0),
            # so no wrapper-side padding / slicing HBM passes are needed.
            in_specs=[pl.BlockSpec((block_n, D), lambda i: (i, 0))],
            out_specs=pl.BlockSpec((block_n, D), lambda i: (i, 0)),
        ),
        compiler_params=pltpu.CompilerParams(
            dimension_semantics=("parallel",),
            vmem_limit_bytes=vmem_limit,
        ),
        cost_estimate=pl.CostEstimate(
            flops=3 * N * D,                      # square + row-sum + scale
            transcendentals=2 * N,                # sqrt + reciprocal per row
            bytes_accessed=2 * N * D * itemsize,  # read + write, bandwidth-bound
        ),
    )(x)


def _reference(x):
    xf = x.astype(jnp.float32)
    norm = jnp.power(jnp.sum(jnp.power(xf, POWER), axis=1, keepdims=True),
                     1.0 / POWER)
    return (xf / (norm + EPS)).astype(x.dtype)


if __name__ == "__main__":
    key = jax.random.PRNGKey(0)
    k1, k2, k3 = jax.random.split(key, 3)

    # Case 1: the module's toy 2-D contract (batch, features), aligned D.
    x1 = jax.random.normal(k1, (8, 32), dtype=jnp.float32)
    out1 = jax.block_until_ready(l2_normalize(x1))
    assert jnp.allclose(out1, _reference(x1), atol=1e-5, rtol=1e-5), "mismatch (8,32)"

    # Case 2: unaligned last dim (200 % 128 != 0) handled without any padding pass.
    x2 = jax.random.normal(k2, (24, 200), dtype=jnp.float32)
    out2 = jax.block_until_ready(l2_normalize(x2))
    assert jnp.allclose(out2, _reference(x2), atol=1e-5, rtol=1e-5), "mismatch (24,200)"

    # Case 3: forced small row tile -> multi-step grid with a partial edge tile
    # along N (exercises Pallas block clipping of out-of-bounds rows).
    x3 = jax.random.normal(k3, (20, 200), dtype=jnp.float32)
    out3 = jax.block_until_ready(l2_normalize(x3, block_n=8))
    assert jnp.allclose(out3, _reference(x3), atol=1e-5, rtol=1e-5), "mismatch (20,200)"

    print("KERNEL_OK")
</pallas_src>

<mosaic_0001>
module attributes {stable_mosaic.version = 11 : i64} {
  func.func @_normalize_kernel(%arg0: i32, %arg1: memref<8x32xf32, #tpu.memory_space<vmem>>, %arg2: memref<8x32xf32, #tpu.memory_space<vmem>>) attributes {dimension_semantics = [#tpu.dimension_semantics<parallel>], iteration_bounds = array<i64: 1>, scalar_prefetch = 0 : i64, scratch_operands = 0 : i64, tpu.core_type = #tpu.core_type<tc>, window_params = [{transform_indices = @transform_0, window_bounds = array<i64: 8, 32>}, {transform_indices = @transform_1, window_bounds = array<i64: 8, 32>}]} {
    %c0 = arith.constant 0 : index
    %c0_0 = arith.constant 0 : index
    %0 = vector.load %arg1[%c0, %c0_0] : memref<8x32xf32, #tpu.memory_space<vmem>>, vector<8x32xf32>
    %1 = arith.mulf %0, %0 : vector<8x32xf32>
    %cst = arith.constant dense<0.000000e+00> : vector<8xf32>
    %2 = vector.multi_reduction <add>, %1, %cst [1] : vector<8x32xf32> to vector<8xf32>
    %3 = vector.shape_cast %2 : vector<8xf32> to vector<8x1xf32>
    %4 = math.sqrt %3 : vector<8x1xf32>
    %cst_1 = arith.constant 1.000000e-07 : f32
    %5 = vector.broadcast %cst_1 : f32 to vector<8x1xf32>
    %6 = arith.addf %4, %5 : vector<8x1xf32>
    %7 = tpu.reciprocal %6 : vector<8x1xf32> -> vector<8x1xf32>
    %8 = vector.broadcast %7 : vector<8x1xf32> to vector<8x32xf32>
    %9 = arith.mulf %0, %8 : vector<8x32xf32>
    %c0_2 = arith.constant 0 : index
    %c0_3 = arith.constant 0 : index
    %10 = vector.load %arg2[%c0_2, %c0_3] : memref<8x32xf32, #tpu.memory_space<vmem>>, vector<8x32xf32>
    tpu.vector_store %arg2[%c0_2, %c0_3], %9 {strides = array<i32>} : memref<8x32xf32, #tpu.memory_space<vmem>>, vector<8x32xf32>,
    return
  }
  func.func @transform_0(%arg0: i32) -> (i32, i32) {
    %c0_i32 = arith.constant 0 : i32
    %c0_i32_0 = arith.constant 0 : i32
    return %arg0, %c0_i32 : i32, i32
  }
  func.func @transform_1(%arg0: i32) -> (i32, i32) {
    %c0_i32 = arith.constant 0 : i32
    %c0_i32_0 = arith.constant 0 : i32
    return %arg0, %c0_i32 : i32, i32
  }
}

</mosaic_0001>

<llo_original>
// kernel: tpu_custom_call.1
$region0: #{tpu_custom_call.1}
  #allocation0 [shape = 'u32[]', space=smem, size = 0x4, offset = 0x4, fixed_abs, tag = 'smem constant byte address 0x4 - core index']
  #allocation1 [shape = 'u32[144,128]{1,0:T(1,128)}', space=vmem, size = 0x12000, scoped, tag = 'internal scratch']
  %s0 = inlined_call_operand.hbm [shape: f32[8,32], index: 0, kind: input, shape index: {}]
  %s1 = inlined_call_operand.hbm [shape: f32[8,32], index: 1, kind: output, shape index: {}]
  %s2 = sld [smem:[#allocation0]]
  $region18: #{tpu_custom_call.1} parent=0
    _
  %s4 = ssub.s32 1, %s2
  %s5 = scalar_select 0, %s4, %s2
  $region1: #{tpu_custom_call.1} parent=0
    #allocation2 [shape = 'u8[4096]{0}', space=vmem, size = 0x1000, scoped, tag = 'input window, operand 0, single buffered']
    #allocation3 [shape = 's32[1]{0}', space=sflag, size = 0x4, scoped, tag = 'scoped memory for tpu_custom_call.1']
    #allocation4 [shape = 's32[1]{0}', space=sflag, size = 0x4, scoped, tag = 'scoped memory for tpu_custom_call.1']
    #allocation5 [shape = 'u8[4096]{0}', space=vmem, size = 0x1000, scoped, tag = 'output window, operand 0, single buffered']
    %6 = vsyncpa [#allocation3], 0
    %7 = vsyncpa [#allocation4], 0
    // Predicated region
    $region2: #{tpu_custom_call.1} parent=1 // pred_check
      _
    $region3: #{tpu_custom_call.1} parent=1 // pred_check_branch
      %9 = sbr.rel (0) target = $region5
    $region4: #{tpu_custom_call.1} parent=1 // pred_region
      %s11 = ssub.s32 128, 128
      %12 = vsyncadd [#allocation3], %s11
      %s14 = sshll.u32 [#allocation2], 4
      %s15 = int_to_ptr.vmem [resolvable:$true] %s14
      %17 = dma.hbm_to_vmem [thread:$0]  %s0, 128, %s15, [#allocation3]
    $region5: #{tpu_custom_call.1} parent=1 // pred_fallthru
      _
    // Predicated region
    $region6: #{tpu_custom_call.1} parent=1 // pred_check
      _
    $region7: #{tpu_custom_call.1} parent=1 // pred_check_branch
      %19 = sbr.rel (0) target = $region9
    $region8: #{tpu_custom_call.1} parent=1 // pred_region
      %20 = dma.done [#allocation3], 128
    $region9: #{tpu_custom_call.1} parent=1 // pred_fallthru
      _
    %v21 = vld [vmem:[#allocation2] sm:$0xff]
    %v22 = vmul.f32 %v21, %v21
    %vm23 = vcmask 261120
    %v24 = vsel %vm23, %v22, 0.0
    %25 = vadd.xlane.f32.xlu0 %v24
    %v26 = vpop.xlane.xlu0 %25
    %v27 = vrsqrt.pop %v26
    %v28 = vmul.f32 %v26, %v27
    %vm29 = vcmp.eq.f32.partialorder %v26, inf
    %v30 = vsel %vm29, %v26, %v28
    %vm31 = vcmp.eq.f32.partialorder %v26, 0.0
    %v32 = vand.u32 %v26, 2147483648
    %v33 = vsel %vm31, %v32, %v30
    %v34 = vadd.f32 %v33, 1e-07
    %v35 = vrcp.pop %v34
    %v36 = vmul.f32 %v21, %v35
    %37 = vst.msk [vmem:[#allocation5] sm:$0xff] %vm23, %v36
    // Predicated region
    $region10: #{tpu_custom_call.1} parent=1 // pred_check
      _
    $region11: #{tpu_custom_call.1} parent=1 // pred_check_branch
      %39 = sbr.rel (0) target = $region13
    $region12: #{tpu_custom_call.1} parent=1 // pred_region
      %s41 = ssub.s32 128, 128
      %42 = vsyncadd [#allocation4], %s41
      %s44 = sshll.u32 [#allocation5], 4
      %s45 = int_to_ptr.vmem [resolvable:$true] %s44
      %47 = dma.vmem_to_hbm [thread:$0]  %s45, 128, %s1, [#allocation4]
    $region13: #{tpu_custom_call.1} parent=1 // pred_fallthru
      _
    // Predicated region
    $region14: #{tpu_custom_call.1} parent=1 // pred_check
      _
    $region15: #{tpu_custom_call.1} parent=1 // pred_check_branch
      %49 = sbr.rel (0) target = $region17
    $region16: #{tpu_custom_call.1} parent=1 // pred_region
      %50 = dma.done [#allocation4], 128
    $region17: #{tpu_custom_call.1} parent=1 // pred_fallthru
      _
    %51 = vsyncpa [#allocation3], 1
    %52 = vsyncpa [#allocation4], 1

</llo_original>
